<compile_context>
chip_gen: v5e
topology: v5e:2x2
jax: 0.10.0
libtpu: 0.0.40
codegen_flags: <defaults>
</compile_context>

<pallas_src>
import math

import jax
import jax.numpy as jnp
from jax.experimental import pallas as pl
from jax.experimental.pallas import tpu as pltpu

# ----------------------------- sizes -----------------------------
B = 2            # batch
S = 8            # sequence length
D = 32           # transformer hidden dim (transformer_dim)
F = 64           # transformer FFN dim
VOCAB = 50
VOCAB_PAD = 128  # one-hot / token-table contraction dim (lane-aligned)
FP = 64          # fingerprint dim (neural_model.input_dim)
H1, H2 = 48, 32  # neural_model.hidden_dims -> neural_dim = H2
HD = 32          # HybridModel hidden_dim (small stand-in for 512)
HD2 = HD // 2    # 16
EPS = 1e-5
BS = B * S

# -------- packed parameter slab (width 128): row offsets (all 8-aligned) ------
R_TOK = 0                      # (VOCAB_PAD, D)  token table (rows >= VOCAB are zero)
R_POS = R_TOK + VOCAB_PAD      # (BS, D)         positional embedding, pre-tiled to batch
R_WO = R_POS + BS              # (128, D)        Wo, rows >= D are zero (ctx is 128-lane padded)
R_WF1 = R_WO + 128             # (D, F)
R_WF2 = R_WF1 + D              # (F, D)
R_WM1 = R_WF2 + F              # (FP, H1)
R_WM2 = R_WM1 + FP             # (H1, H2)
R_FC1P = R_WM2 + H1            # (D, HD)         fc1 rows acting on `pooled`
R_FC1N = R_FC1P + D            # (H2, HD)        fc1 rows acting on `neural`
R_FC2 = R_FC1N + H2            # (HD, HD2)
R_FC3 = R_FC2 + HD             # (HD2, 1)
R_VEC = R_FC3 + HD2            # 24 rows of packed 1-D params (biases / LN / BN)
VEC_ROWS = 24
W_ROWS = R_VEC + VEC_ROWS      # 616 total rows

VROW = {
    "bq": 0, "bk": 1, "bv": 2,                 # width 128 (first D meaningful)
    "bo": 3, "ln1_g": 4, "ln1_b": 5,           # width D
    "bf1": 6,                                  # width F
    "bf2": 7, "ln2_g": 8, "ln2_b": 9,          # width D
    "bm1": 10,                                 # width H1
    "bm2": 11,                                 # width H2
    "bfc1": 12, "bn1_g": 13, "bn1_b": 14, "bn1_m": 15, "bn1_v": 16,   # width HD
    "bfc2": 17, "bn2_g": 18, "bn2_b": 19, "bn2_m": 20, "bn2_v": 21,   # width HD2
    "bfc3": 22,                                # width 1
}


# ================================================================
# Single fused kernel: one-hot embedding gather -> transformer layer
#   -> CLS pool -> fingerprint MLP -> split fc head
# ================================================================
def hybrid_kernel(ids_ref,    # (BS, 1) int32
                  bias_ref,   # (BS, BS) f32  block-diag + key-padding additive bias
                  fp_ref,     # (B, FP) f32
                  wqkv_ref,   # (D, 3*128) f32  fused Wq|Wk|Wv, each lane-padded to 128
                  w_ref,      # (W_ROWS, 128) f32  packed parameter slab
                  out_ref):   # (B, 1) f32

    def wblk(row, nrows, ncols):
        return w_ref[row:row + nrows, 0:ncols]

    Vs = w_ref[R_VEC:R_VEC + VEC_ROWS, :]        # (24, 128) packed 1-D params

    def vrow(name, width):
        r = VROW[name]
        return Vs[r:r + 1, 0:width]

    # ---- token embedding gather as one MXU matmul (no scalar stores) ----
    ids = ids_ref[...]                                                  # (BS, 1) int32
    lane = jax.lax.broadcasted_iota(jnp.int32, (BS, VOCAB_PAD), 1)
    onehot = (lane == ids).astype(jnp.float32)                          # (BS, VOCAB_PAD)
    x = jnp.dot(onehot, wblk(R_TOK, VOCAB_PAD, D),
                preferred_element_type=jnp.float32)                     # (BS, D)
    x = x + wblk(R_POS, BS, D)                                          # pre-tiled pos emb

    # ---- single-layer single-head encoder, whole batch fused ----
    qkv = jnp.dot(x, wqkv_ref[...], preferred_element_type=jnp.float32)  # (BS, 384)
    q = qkv[:, 0:128] + vrow("bq", 128)          # 128-aligned slices; pad lanes stay 0
    k = qkv[:, 128:256] + vrow("bk", 128)
    v = qkv[:, 256:384] + vrow("bv", 128)

    scale = 1.0 / math.sqrt(D)
    sc = jax.lax.dot_general(q, k, (((1,), (1,)), ((), ())),
                             preferred_element_type=jnp.float32) * scale  # (BS, BS)
    sc = sc + bias_ref[...]                       # block-diagonal + padding mask
    sc = sc - sc.max(axis=-1, keepdims=True)
    p = jnp.exp(sc)
    attn = p * pl.reciprocal(p.sum(axis=-1, keepdims=True), approx=True)
    ctx = jnp.dot(attn, v, preferred_element_type=jnp.float32)            # (BS, 128)

    attn_out = (jnp.dot(ctx, wblk(R_WO, 128, D),
                        preferred_element_type=jnp.float32) + vrow("bo", D))

    # residual + LayerNorm 1
    h = x + attn_out
    mu = jnp.mean(h, axis=-1, keepdims=True)
    var = jnp.mean((h - mu) ** 2, axis=-1, keepdims=True)
    h = (h - mu) * jax.lax.rsqrt(var + EPS) * vrow("ln1_g", D) + vrow("ln1_b", D)

    # feed-forward
    ff = jnp.maximum(jnp.dot(h, wblk(R_WF1, D, F),
                             preferred_element_type=jnp.float32) + vrow("bf1", F), 0.0)
    ff = jnp.dot(ff, wblk(R_WF2, F, D),
                 preferred_element_type=jnp.float32) + vrow("bf2", D)

    # residual + LayerNorm 2
    h2 = h + ff
    mu2 = jnp.mean(h2, axis=-1, keepdims=True)
    var2 = jnp.mean((h2 - mu2) ** 2, axis=-1, keepdims=True)
    enc = (h2 - mu2) * jax.lax.rsqrt(var2 + EPS) * vrow("ln2_g", D) + vrow("ln2_b", D)

    # CLS pooling: last_hidden_state[:, 0, :] -> rows {0, S} of the flat slab (B=2)
    pooled = jnp.concatenate([enc[b * S:b * S + 1, :] for b in range(B)], axis=0)  # (B, D)

    # ---- neural_encoder = neural_model.layers[:-1] (Linear+ReLU, Linear+ReLU) ----
    fp = fp_ref[...]                                                    # (B, FP)
    n = jnp.maximum(jnp.dot(fp, wblk(R_WM1, FP, H1),
                            preferred_element_type=jnp.float32) + vrow("bm1", H1), 0.0)
    n = jnp.maximum(jnp.dot(n, wblk(R_WM2, H1, H2),
                            preferred_element_type=jnp.float32) + vrow("bm2", H2), 0.0)

    # ---- fc_layers on cat([pooled, neural], dim=1): split matmul (no lane concat) ----
    hh = (jnp.dot(pooled, wblk(R_FC1P, D, HD), preferred_element_type=jnp.float32)
          + jnp.dot(n, wblk(R_FC1N, H2, HD), preferred_element_type=jnp.float32)
          + vrow("bfc1", HD))                                           # (B, HD)
    # BatchNorm1d (eval: running stats) + ReLU; Dropout is identity in eval.
    hh = ((hh - vrow("bn1_m", HD)) * jax.lax.rsqrt(vrow("bn1_v", HD) + EPS)
          * vrow("bn1_g", HD) + vrow("bn1_b", HD))
    hh = jnp.maximum(hh, 0.0)

    hh = (jnp.dot(hh, wblk(R_FC2, HD, HD2),
                  preferred_element_type=jnp.float32) + vrow("bfc2", HD2))   # (B, HD2)
    hh = ((hh - vrow("bn2_m", HD2)) * jax.lax.rsqrt(vrow("bn2_v", HD2) + EPS)
          * vrow("bn2_g", HD2) + vrow("bn2_b", HD2))
    hh = jnp.maximum(hh, 0.0)

    out_ref[...] = (jnp.dot(hh, wblk(R_FC3, HD2, 1),
                            preferred_element_type=jnp.float32) + vrow("bfc3", 1))


# ================================================================
# Wrapper: one pallas_call, 5 operands, no grid, no scratch
# ================================================================
@jax.jit
def hybrid_forward(input_ids, attention_mask, fingerprint, params):
    # Tiny per-call prep outside the kernel (per review): flattened ids for the
    # one-hot gather, and the additive block-diagonal + key-padding bias.
    ids = input_ids.reshape(BS, 1).astype(jnp.int32)
    keep = attention_mask.reshape(BS).astype(jnp.float32)
    bidx = jnp.arange(BS, dtype=jnp.int32) // S
    same = (bidx[:, None] == bidx[None, :]).astype(jnp.float32)
    attn_bias = (same * keep[None, :] - 1.0) * 1e9        # 0 where attended, -1e9 otherwise

    vmem = pl.BlockSpec(memory_space=pltpu.MemorySpace.VMEM)
    return pl.pallas_call(
        hybrid_kernel,
        out_shape=jax.ShapeDtypeStruct((B, 1), jnp.float32),
        in_specs=[vmem] * 5,
        out_specs=vmem,
    )(ids, attn_bias, fingerprint, params["wqkv"], params["wslab"])


# ================================================================
# Deterministic in-script parameter init (packed slab layout)
# ================================================================
def init_params(key):
    ks = iter(jax.random.split(key, 20))
    nrm = lambda shape, s=0.05: (s * jax.random.normal(next(ks), shape)).astype(jnp.float32)

    tok, pos = nrm((VOCAB, D)), nrm((S, D))
    wq, wk, wv, wo = nrm((D, D)), nrm((D, D)), nrm((D, D)), nrm((D, D))
    wf1, wf2 = nrm((D, F)), nrm((F, D))
    wm1, wm2 = nrm((FP, H1)), nrm((H1, H2))
    wfc1_p, wfc1_n = nrm((D, HD)), nrm((H2, HD))
    wfc2, wfc3 = nrm((HD, HD2)), nrm((HD2, 1))

    # fused Wq|Wk|Wv, each output block zero-padded to 128 lanes (aligned q/k/v slices)
    wqkv = jnp.zeros((D, 3 * 128), jnp.float32)
    wqkv = wqkv.at[:, 0:D].set(wq).at[:, 128:128 + D].set(wk).at[:, 256:256 + D].set(wv)

    w = jnp.zeros((W_ROWS, 128), jnp.float32)
    w = w.at[R_TOK:R_TOK + VOCAB, 0:D].set(tok)
    w = w.at[R_POS:R_POS + BS, 0:D].set(jnp.tile(pos, (B, 1)))      # pre-tiled to batch
    w = w.at[R_WO:R_WO + D, 0:D].set(wo)                             # rows D..127 stay zero
    w = w.at[R_WF1:R_WF1 + D, 0:F].set(wf1)
    w = w.at[R_WF2:R_WF2 + F, 0:D].set(wf2)
    w = w.at[R_WM1:R_WM1 + FP, 0:H1].set(wm1)
    w = w.at[R_WM2:R_WM2 + H1, 0:H2].set(wm2)
    w = w.at[R_FC1P:R_FC1P + D, 0:HD].set(wfc1_p)
    w = w.at[R_FC1N:R_FC1N + H2, 0:HD].set(wfc1_n)
    w = w.at[R_FC2:R_FC2 + HD, 0:HD2].set(wfc2)
    w = w.at[R_FC3:R_FC3 + HD2, 0:1].set(wfc3)

    # biases / LN-BN betas / running means are zero (slab default);
    # LN/BN gammas and BN running vars are one.
    def put(slab, name, value):
        return slab.at[R_VEC + VROW[name], :value.shape[0]].set(value)

    ones = lambda n: jnp.ones((n,), jnp.float32)
    for name, width in (("ln1_g", D), ("ln2_g", D), ("bn1_g", HD), ("bn1_v", HD),
                        ("bn2_g", HD2), ("bn2_v", HD2)):
        w = put(w, name, ones(width))

    return {"wqkv": wqkv, "wslab": w}


if __name__ == "__main__":
    key = jax.random.PRNGKey(0)
    k_ids, k_fp, k_par = jax.random.split(key, 3)

    input_ids = jax.random.randint(k_ids, (B, S), 0, VOCAB, dtype=jnp.int32)
    attention_mask = jnp.array([[1, 1, 1, 1, 1, 1, 1, 1],
                                [1, 1, 1, 1, 1, 1, 0, 0]], dtype=jnp.int32)
    fingerprint = jax.random.normal(k_fp, (B, FP), dtype=jnp.float32)

    params = init_params(k_par)

    out = hybrid_forward(input_ids, attention_mask, fingerprint, params)
    out = jax.block_until_ready(out)
    assert out.shape == (B, 1) and out.dtype == jnp.float32
    print("KERNEL_OK")
</pallas_src>

<mosaic_0001>
module attributes {stable_mosaic.version = 11 : i64} {
  func.func @hybrid_kernel(%arg0: memref<16x1xi32, #tpu.memory_space<vmem>>, %arg1: memref<16x16xf32, #tpu.memory_space<vmem>>, %arg2: memref<2x64xf32, #tpu.memory_space<vmem>>, %arg3: memref<32x384xf32, #tpu.memory_space<vmem>>, %arg4: memref<616x128xf32, #tpu.memory_space<vmem>>, %arg5: memref<2x1xf32, #tpu.memory_space<vmem>>) attributes {dimension_semantics = [], scalar_prefetch = 0 : i64, scratch_operands = 0 : i64, tpu.core_type = #tpu.core_type<tc>} {
    %c592 = arith.constant 592 : index
    %c0 = arith.constant 0 : index
    %0 = vector.load %arg4[%c592, %c0] : memref<616x128xf32, #tpu.memory_space<vmem>>, vector<24x128xf32>
    %c0_0 = arith.constant 0 : index
    %c0_1 = arith.constant 0 : index
    %1 = vector.load %arg0[%c0_0, %c0_1] : memref<16x1xi32, #tpu.memory_space<vmem>>, vector<16x1xi32>
    %2 = tpu.iota {dimensions = array<i32: 1>} : vector<16x128xi32>
    %3 = vector.broadcast %1 : vector<16x1xi32> to vector<16x128xi32>
    %4 = arith.cmpi eq, %2, %3 : vector<16x128xi32>
    %5 = arith.extui %4 : vector<16x128xi1> to vector<16x128xi32>
    %6 = arith.sitofp %5 : vector<16x128xi32> to vector<16x128xf32>
    %c0_2 = arith.constant 0 : index
    %c0_3 = arith.constant 0 : index
    %7 = vector.load %arg4[%c0_2, %c0_3] : memref<616x128xf32, #tpu.memory_space<vmem>>, vector<128x32xf32>
    %cst = arith.constant dense<0.000000e+00> : vector<16x32xf32>
    %8 = tpu.matmul %6, %7, %cst {dimension_numbers = #tpu.dot_dimension_numbers<[1], [0], [0], [1], [0, 0, 1, 1], [], []>} : vector<16x128xf32>, vector<128x32xf32>, vector<16x32xf32> -> vector<16x32xf32>
    %c128 = arith.constant 128 : index
    %c0_4 = arith.constant 0 : index
    %9 = vector.load %arg4[%c128, %c0_4] : memref<616x128xf32, #tpu.memory_space<vmem>>, vector<16x32xf32>
    %10 = arith.addf %8, %9 : vector<16x32xf32>
    %c0_5 = arith.constant 0 : index
    %c0_6 = arith.constant 0 : index
    %11 = vector.load %arg3[%c0_5, %c0_6] : memref<32x384xf32, #tpu.memory_space<vmem>>, vector<32x384xf32>
    %cst_7 = arith.constant dense<0.000000e+00> : vector<16x384xf32>
    %12 = tpu.matmul %10, %11, %cst_7 {dimension_numbers = #tpu.dot_dimension_numbers<[1], [0], [0], [1], [0, 0, 1, 1], [], []>} : vector<16x32xf32>, vector<32x384xf32>, vector<16x384xf32> -> vector<16x384xf32>
    %13 = vector.extract_strided_slice %12 {offsets = [0, 0], sizes = [16, 128], strides = [1, 1]} : vector<16x384xf32> to vector<16x128xf32>
    %14 = vector.extract_strided_slice %0 {offsets = [0, 0], sizes = [1, 128], strides = [1, 1]} : vector<24x128xf32> to vector<1x128xf32>
    %15 = vector.broadcast %14 : vector<1x128xf32> to vector<16x128xf32>
    %16 = arith.addf %13, %15 : vector<16x128xf32>
    %17 = vector.extract_strided_slice %12 {offsets = [0, 128], sizes = [16, 128], strides = [1, 1]} : vector<16x384xf32> to vector<16x128xf32>
    %18 = vector.extract_strided_slice %0 {offsets = [1, 0], sizes = [1, 128], strides = [1, 1]} : vector<24x128xf32> to vector<1x128xf32>
    %19 = vector.broadcast %18 : vector<1x128xf32> to vector<16x128xf32>
    %20 = arith.addf %17, %19 : vector<16x128xf32>
    %21 = vector.extract_strided_slice %12 {offsets = [0, 256], sizes = [16, 128], strides = [1, 1]} : vector<16x384xf32> to vector<16x128xf32>
    %22 = vector.extract_strided_slice %0 {offsets = [2, 0], sizes = [1, 128], strides = [1, 1]} : vector<24x128xf32> to vector<1x128xf32>
    %23 = vector.broadcast %22 : vector<1x128xf32> to vector<16x128xf32>
    %24 = arith.addf %21, %23 : vector<16x128xf32>
    %cst_8 = arith.constant dense<0.000000e+00> : vector<16x16xf32>
    %25 = tpu.matmul %16, %20, %cst_8 {dimension_numbers = #tpu.dot_dimension_numbers<[1], [1], [0], [0], [0, 0, 1, 0], [], []>} : vector<16x128xf32>, vector<16x128xf32>, vector<16x16xf32> -> vector<16x16xf32>
    %cst_9 = arith.constant 0.176776692 : f32
    %26 = vector.broadcast %cst_9 : f32 to vector<16x16xf32>
    %27 = arith.mulf %25, %26 : vector<16x16xf32>
    %c0_10 = arith.constant 0 : index
    %c0_11 = arith.constant 0 : index
    %28 = vector.load %arg1[%c0_10, %c0_11] : memref<16x16xf32, #tpu.memory_space<vmem>>, vector<16x16xf32>
    %29 = arith.addf %27, %28 : vector<16x16xf32>
    %cst_12 = arith.constant dense<0xFF800000> : vector<16xf32>
    %30 = vector.multi_reduction <maximumf>, %29, %cst_12 [1] : vector<16x16xf32> to vector<16xf32>
    %31 = vector.shape_cast %30 : vector<16xf32> to vector<16x1xf32>
    %32 = vector.broadcast %31 : vector<16x1xf32> to vector<16x16xf32>
    %33 = arith.subf %29, %32 : vector<16x16xf32>
    %34 = math.exp %33 : vector<16x16xf32>
    %cst_13 = arith.constant dense<0.000000e+00> : vector<16xf32>
    %35 = vector.multi_reduction <add>, %34, %cst_13 [1] : vector<16x16xf32> to vector<16xf32>
    %36 = vector.shape_cast %35 : vector<16xf32> to vector<16x1xf32>
    %37 = tpu.reciprocal %36 {approx = true} : vector<16x1xf32> -> vector<16x1xf32>
    %38 = vector.broadcast %37 : vector<16x1xf32> to vector<16x16xf32>
    %39 = arith.mulf %34, %38 : vector<16x16xf32>
    %cst_14 = arith.constant dense<0.000000e+00> : vector<16x128xf32>
    %40 = tpu.matmul %39, %24, %cst_14 {dimension_numbers = #tpu.dot_dimension_numbers<[1], [0], [0], [1], [0, 0, 1, 1], [], []>} : vector<16x16xf32>, vector<16x128xf32>, vector<16x128xf32> -> vector<16x128xf32>
    %c144 = arith.constant 144 : index
    %c0_15 = arith.constant 0 : index
    %41 = vector.load %arg4[%c144, %c0_15] : memref<616x128xf32, #tpu.memory_space<vmem>>, vector<128x32xf32>
    %cst_16 = arith.constant dense<0.000000e+00> : vector<16x32xf32>
    %42 = tpu.matmul %40, %41, %cst_16 {dimension_numbers = #tpu.dot_dimension_numbers<[1], [0], [0], [1], [0, 0, 1, 1], [], []>} : vector<16x128xf32>, vector<128x32xf32>, vector<16x32xf32> -> vector<16x32xf32>
    %43 = vector.extract_strided_slice %0 {offsets = [3, 0], sizes = [1, 32], strides = [1, 1]} : vector<24x128xf32> to vector<1x32xf32>
    %44 = vector.broadcast %43 : vector<1x32xf32> to vector<16x32xf32>
    %45 = arith.addf %42, %44 : vector<16x32xf32>
    %46 = arith.addf %10, %45 : vector<16x32xf32>
    %cst_17 = arith.constant dense<0.000000e+00> : vector<16xf32>
    %47 = vector.multi_reduction <add>, %46, %cst_17 [1] : vector<16x32xf32> to vector<16xf32>
    %48 = vector.shape_cast %47 : vector<16xf32> to vector<16x1xf32>
    %cst_18 = arith.constant 3.200000e+01 : f32
    %49 = vector.broadcast %cst_18 : f32 to vector<16x1xf32>
    %50 = arith.divf %48, %49 : vector<16x1xf32>
    %51 = vector.broadcast %50 : vector<16x1xf32> to vector<16x32xf32>
    %52 = arith.subf %46, %51 : vector<16x32xf32>
    %53 = arith.mulf %52, %52 : vector<16x32xf32>
    %cst_19 = arith.constant dense<0.000000e+00> : vector<16xf32>
    %54 = vector.multi_reduction <add>, %53, %cst_19 [1] : vector<16x32xf32> to vector<16xf32>
    %55 = vector.shape_cast %54 : vector<16xf32> to vector<16x1xf32>
    %cst_20 = arith.constant 3.200000e+01 : f32
    %56 = vector.broadcast %cst_20 : f32 to vector<16x1xf32>
    %57 = arith.divf %55, %56 : vector<16x1xf32>
    %58 = vector.broadcast %50 : vector<16x1xf32> to vector<16x32xf32>
    %59 = arith.subf %46, %58 : vector<16x32xf32>
    %cst_21 = arith.constant 9.99999974E-6 : f32
    %60 = vector.broadcast %cst_21 : f32 to vector<16x1xf32>
    %61 = arith.addf %57, %60 : vector<16x1xf32>
    %62 = math.rsqrt %61 : vector<16x1xf32>
    %63 = vector.broadcast %62 : vector<16x1xf32> to vector<16x32xf32>
    %64 = arith.mulf %59, %63 : vector<16x32xf32>
    %65 = vector.extract_strided_slice %0 {offsets = [4, 0], sizes = [1, 32], strides = [1, 1]} : vector<24x128xf32> to vector<1x32xf32>
    %66 = vector.broadcast %65 : vector<1x32xf32> to vector<16x32xf32>
    %67 = arith.mulf %64, %66 : vector<16x32xf32>
    %68 = vector.extract_strided_slice %0 {offsets = [5, 0], sizes = [1, 32], strides = [1, 1]} : vector<24x128xf32> to vector<1x32xf32>
    %69 = vector.broadcast %68 : vector<1x32xf32> to vector<16x32xf32>
    %70 = arith.addf %67, %69 : vector<16x32xf32>
    %c272 = arith.constant 272 : index
    %c0_22 = arith.constant 0 : index
    %71 = vector.load %arg4[%c272, %c0_22] : memref<616x128xf32, #tpu.memory_space<vmem>>, vector<32x64xf32>
    %cst_23 = arith.constant dense<0.000000e+00> : vector<16x64xf32>
    %72 = tpu.matmul %70, %71, %cst_23 {dimension_numbers = #tpu.dot_dimension_numbers<[1], [0], [0], [1], [0, 0, 1, 1], [], []>} : vector<16x32xf32>, vector<32x64xf32>, vector<16x64xf32> -> vector<16x64xf32>
    %73 = vector.extract_strided_slice %0 {offsets = [6, 0], sizes = [1, 64], strides = [1, 1]} : vector<24x128xf32> to vector<1x64xf32>
    %74 = vector.broadcast %73 : vector<1x64xf32> to vector<16x64xf32>
    %75 = arith.addf %72, %74 : vector<16x64xf32>
    %cst_24 = arith.constant 0.000000e+00 : f32
    %76 = vector.broadcast %cst_24 : f32 to vector<16x64xf32>
    %77 = arith.maximumf %75, %76 : vector<16x64xf32>
    %c304 = arith.constant 304 : index
    %c0_25 = arith.constant 0 : index
    %78 = vector.load %arg4[%c304, %c0_25] : memref<616x128xf32, #tpu.memory_space<vmem>>, vector<64x32xf32>
    %cst_26 = arith.constant dense<0.000000e+00> : vector<16x32xf32>
    %79 = tpu.matmul %77, %78, %cst_26 {dimension_numbers = #tpu.dot_dimension_numbers<[1], [0], [0], [1], [0, 0, 1, 1], [], []>} : vector<16x64xf32>, vector<64x32xf32>, vector<16x32xf32> -> vector<16x32xf32>
    %80 = vector.extract_strided_slice %0 {offsets = [7, 0], sizes = [1, 32], strides = [1, 1]} : vector<24x128xf32> to vector<1x32xf32>
    %81 = vector.broadcast %80 : vector<1x32xf32> to vector<16x32xf32>
    %82 = arith.addf %79, %81 : vector<16x32xf32>
    %83 = arith.addf %70, %82 : vector<16x32xf32>
    %cst_27 = arith.constant dense<0.000000e+00> : vector<16xf32>
    %84 = vector.multi_reduction <add>, %83, %cst_27 [1] : vector<16x32xf32> to vector<16xf32>
    %85 = vector.shape_cast %84 : vector<16xf32> to vector<16x1xf32>
    %cst_28 = arith.constant 3.200000e+01 : f32
    %86 = vector.broadcast %cst_28 : f32 to vector<16x1xf32>
    %87 = arith.divf %85, %86 : vector<16x1xf32>
    %88 = vector.broadcast %87 : vector<16x1xf32> to vector<16x32xf32>
    %89 = arith.subf %83, %88 : vector<16x32xf32>
    %90 = arith.mulf %89, %89 : vector<16x32xf32>
    %cst_29 = arith.constant dense<0.000000e+00> : vector<16xf32>
    %91 = vector.multi_reduction <add>, %90, %cst_29 [1] : vector<16x32xf32> to vector<16xf32>
    %92 = vector.shape_cast %91 : vector<16xf32> to vector<16x1xf32>
    %cst_30 = arith.constant 3.200000e+01 : f32
    %93 = vector.broadcast %cst_30 : f32 to vector<16x1xf32>
    %94 = arith.divf %92, %93 : vector<16x1xf32>
    %95 = vector.broadcast %87 : vector<16x1xf32> to vector<16x32xf32>
    %96 = arith.subf %83, %95 : vector<16x32xf32>
    %cst_31 = arith.constant 9.99999974E-6 : f32
    %97 = vector.broadcast %cst_31 : f32 to vector<16x1xf32>
    %98 = arith.addf %94, %97 : vector<16x1xf32>
    %99 = math.rsqrt %98 : vector<16x1xf32>
    %100 = vector.broadcast %99 : vector<16x1xf32> to vector<16x32xf32>
    %101 = arith.mulf %96, %100 : vector<16x32xf32>
    %102 = vector.extract_strided_slice %0 {offsets = [8, 0], sizes = [1, 32], strides = [1, 1]} : vector<24x128xf32> to vector<1x32xf32>
    %103 = vector.broadcast %102 : vector<1x32xf32> to vector<16x32xf32>
    %104 = arith.mulf %101, %103 : vector<16x32xf32>
    %105 = vector.extract_strided_slice %0 {offsets = [9, 0], sizes = [1, 32], strides = [1, 1]} : vector<24x128xf32> to vector<1x32xf32>
    %106 = vector.broadcast %105 : vector<1x32xf32> to vector<16x32xf32>
    %107 = arith.addf %104, %106 : vector<16x32xf32>
    %108 = vector.extract_strided_slice %107 {offsets = [0, 0], sizes = [1, 32], strides = [1, 1]} : vector<16x32xf32> to vector<1x32xf32>
    %109 = vector.extract_strided_slice %107 {offsets = [8, 0], sizes = [1, 32], strides = [1, 1]} : vector<16x32xf32> to vector<1x32xf32>
    %110 = tpu.concatenate %108, %109 in 0 : vector<1x32xf32>, vector<1x32xf32> -> vector<2x32xf32>
    %c0_32 = arith.constant 0 : index
    %c0_33 = arith.constant 0 : index
    %111 = vector.load %arg2[%c0_32, %c0_33] : memref<2x64xf32, #tpu.memory_space<vmem>>, vector<2x64xf32>
    %c368 = arith.constant 368 : index
    %c0_34 = arith.constant 0 : index
    %112 = vector.load %arg4[%c368, %c0_34] : memref<616x128xf32, #tpu.memory_space<vmem>>, vector<64x48xf32>
    %cst_35 = arith.constant dense<0.000000e+00> : vector<2x48xf32>
    %113 = tpu.matmul %111, %112, %cst_35 {dimension_numbers = #tpu.dot_dimension_numbers<[1], [0], [0], [1], [0, 0, 1, 1], [], []>} : vector<2x64xf32>, vector<64x48xf32>, vector<2x48xf32> -> vector<2x48xf32>
    %114 = vector.extract_strided_slice %0 {offsets = [10, 0], sizes = [1, 48], strides = [1, 1]} : vector<24x128xf32> to vector<1x48xf32>
    %115 = vector.broadcast %114 : vector<1x48xf32> to vector<2x48xf32>
    %116 = arith.addf %113, %115 : vector<2x48xf32>
    %cst_36 = arith.constant 0.000000e+00 : f32
    %117 = vector.broadcast %cst_36 : f32 to vector<2x48xf32>
    %118 = arith.maximumf %116, %117 : vector<2x48xf32>
    %c432 = arith.constant 432 : index
    %c0_37 = arith.constant 0 : index
    %119 = vector.load %arg4[%c432, %c0_37] : memref<616x128xf32, #tpu.memory_space<vmem>>, vector<48x32xf32>
    %cst_38 = arith.constant dense<0.000000e+00> : vector<2x32xf32>
    %120 = tpu.matmul %118, %119, %cst_38 {dimension_numbers = #tpu.dot_dimension_numbers<[1], [0], [0], [1], [0, 0, 1, 1], [], []>} : vector<2x48xf32>, vector<48x32xf32>, vector<2x32xf32> -> vector<2x32xf32>
    %121 = vector.extract_strided_slice %0 {offsets = [11, 0], sizes = [1, 32], strides = [1, 1]} : vector<24x128xf32> to vector<1x32xf32>
    %122 = vector.broadcast %121 : vector<1x32xf32> to vector<2x32xf32>
    %123 = arith.addf %120, %122 : vector<2x32xf32>
    %cst_39 = arith.constant 0.000000e+00 : f32
    %124 = vector.broadcast %cst_39 : f32 to vector<2x32xf32>
    %125 = arith.maximumf %123, %124 : vector<2x32xf32>
    %c480 = arith.constant 480 : index
    %c0_40 = arith.constant 0 : index
    %126 = vector.load %arg4[%c480, %c0_40] : memref<616x128xf32, #tpu.memory_space<vmem>>, vector<32x32xf32>
    %cst_41 = arith.constant dense<0.000000e+00> : vector<2x32xf32>
    %127 = tpu.matmul %110, %126, %cst_41 {dimension_numbers = #tpu.dot_dimension_numbers<[1], [0], [0], [1], [0, 0, 1, 1], [], []>} : vector<2x32xf32>, vector<32x32xf32>, vector<2x32xf32> -> vector<2x32xf32>
    %c512 = arith.constant 512 : index
    %c0_42 = arith.constant 0 : index
    %128 = vector.load %arg4[%c512, %c0_42] : memref<616x128xf32, #tpu.memory_space<vmem>>, vector<32x32xf32>
    %cst_43 = arith.constant dense<0.000000e+00> : vector<2x32xf32>
    %129 = tpu.matmul %125, %128, %cst_43 {dimension_numbers = #tpu.dot_dimension_numbers<[1], [0], [0], [1], [0, 0, 1, 1], [], []>} : vector<2x32xf32>, vector<32x32xf32>, vector<2x32xf32> -> vector<2x32xf32>
    %130 = arith.addf %127, %129 : vector<2x32xf32>
    %131 = vector.extract_strided_slice %0 {offsets = [12, 0], sizes = [1, 32], strides = [1, 1]} : vector<24x128xf32> to vector<1x32xf32>
    %132 = vector.broadcast %131 : vector<1x32xf32> to vector<2x32xf32>
    %133 = arith.addf %130, %132 : vector<2x32xf32>
    %134 = vector.extract_strided_slice %0 {offsets = [15, 0], sizes = [1, 32], strides = [1, 1]} : vector<24x128xf32> to vector<1x32xf32>
    %135 = vector.broadcast %134 : vector<1x32xf32> to vector<2x32xf32>
    %136 = arith.subf %133, %135 : vector<2x32xf32>
    %137 = vector.extract_strided_slice %0 {offsets = [16, 0], sizes = [1, 32], strides = [1, 1]} : vector<24x128xf32> to vector<1x32xf32>
    %cst_44 = arith.constant 9.99999974E-6 : f32
    %138 = vector.broadcast %cst_44 : f32 to vector<1x32xf32>
    %139 = arith.addf %137, %138 : vector<1x32xf32>
    %140 = math.rsqrt %139 : vector<1x32xf32>
    %141 = vector.broadcast %140 : vector<1x32xf32> to vector<2x32xf32>
    %142 = arith.mulf %136, %141 : vector<2x32xf32>
    %143 = vector.extract_strided_slice %0 {offsets = [13, 0], sizes = [1, 32], strides = [1, 1]} : vector<24x128xf32> to vector<1x32xf32>
    %144 = vector.broadcast %143 : vector<1x32xf32> to vector<2x32xf32>
    %145 = arith.mulf %142, %144 : vector<2x32xf32>
    %146 = vector.extract_strided_slice %0 {offsets = [14, 0], sizes = [1, 32], strides = [1, 1]} : vector<24x128xf32> to vector<1x32xf32>
    %147 = vector.broadcast %146 : vector<1x32xf32> to vector<2x32xf32>
    %148 = arith.addf %145, %147 : vector<2x32xf32>
    %cst_45 = arith.constant 0.000000e+00 : f32
    %149 = vector.broadcast %cst_45 : f32 to vector<2x32xf32>
    %150 = arith.maximumf %148, %149 : vector<2x32xf32>
    %c544 = arith.constant 544 : index
    %c0_46 = arith.constant 0 : index
    %151 = vector.load %arg4[%c544, %c0_46] : memref<616x128xf32, #tpu.memory_space<vmem>>, vector<32x16xf32>
    %cst_47 = arith.constant dense<0.000000e+00> : vector<2x16xf32>
    %152 = tpu.matmul %150, %151, %cst_47 {dimension_numbers = #tpu.dot_dimension_numbers<[1], [0], [0], [1], [0, 0, 1, 1], [], []>} : vector<2x32xf32>, vector<32x16xf32>, vector<2x16xf32> -> vector<2x16xf32>
    %153 = vector.extract_strided_slice %0 {offsets = [17, 0], sizes = [1, 16], strides = [1, 1]} : vector<24x128xf32> to vector<1x16xf32>
    %154 = vector.broadcast %153 : vector<1x16xf32> to vector<2x16xf32>
    %155 = arith.addf %152, %154 : vector<2x16xf32>
    %156 = vector.extract_strided_slice %0 {offsets = [20, 0], sizes = [1, 16], strides = [1, 1]} : vector<24x128xf32> to vector<1x16xf32>
    %157 = vector.broadcast %156 : vector<1x16xf32> to vector<2x16xf32>
    %158 = arith.subf %155, %157 : vector<2x16xf32>
    %159 = vector.extract_strided_slice %0 {offsets = [21, 0], sizes = [1, 16], strides = [1, 1]} : vector<24x128xf32> to vector<1x16xf32>
    %cst_48 = arith.constant 9.99999974E-6 : f32
    %160 = vector.broadcast %cst_48 : f32 to vector<1x16xf32>
    %161 = arith.addf %159, %160 : vector<1x16xf32>
    %162 = math.rsqrt %161 : vector<1x16xf32>
    %163 = vector.broadcast %162 : vector<1x16xf32> to vector<2x16xf32>
    %164 = arith.mulf %158, %163 : vector<2x16xf32>
    %165 = vector.extract_strided_slice %0 {offsets = [18, 0], sizes = [1, 16], strides = [1, 1]} : vector<24x128xf32> to vector<1x16xf32>
    %166 = vector.broadcast %165 : vector<1x16xf32> to vector<2x16xf32>
    %167 = arith.mulf %164, %166 : vector<2x16xf32>
    %168 = vector.extract_strided_slice %0 {offsets = [19, 0], sizes = [1, 16], strides = [1, 1]} : vector<24x128xf32> to vector<1x16xf32>
    %169 = vector.broadcast %168 : vector<1x16xf32> to vector<2x16xf32>
    %170 = arith.addf %167, %169 : vector<2x16xf32>
    %cst_49 = arith.constant 0.000000e+00 : f32
    %171 = vector.broadcast %cst_49 : f32 to vector<2x16xf32>
    %172 = arith.maximumf %170, %171 : vector<2x16xf32>
    %c576 = arith.constant 576 : index
    %c0_50 = arith.constant 0 : index
    %173 = vector.load %arg4[%c576, %c0_50] : memref<616x128xf32, #tpu.memory_space<vmem>>, vector<16x1xf32>
    %cst_51 = arith.constant dense<0.000000e+00> : vector<2x1xf32>
    %174 = tpu.matmul %172, %173, %cst_51 {dimension_numbers = #tpu.dot_dimension_numbers<[1], [0], [0], [1], [0, 0, 1, 1], [], []>} : vector<2x16xf32>, vector<16x1xf32>, vector<2x1xf32> -> vector<2x1xf32>
    %175 = vector.extract_strided_slice %0 {offsets = [22, 0], sizes = [1, 1], strides = [1, 1]} : vector<24x128xf32> to vector<1x1xf32>
    %176 = vector.broadcast %175 : vector<1x1xf32> to vector<2x1xf32>
    %177 = arith.addf %174, %176 : vector<2x1xf32>
    %c0_52 = arith.constant 0 : index
    %c0_53 = arith.constant 0 : index
    %178 = vector.load %arg5[%c0_52, %c0_53] : memref<2x1xf32, #tpu.memory_space<vmem>>, vector<2x1xf32>
    tpu.vector_store %arg5[%c0_52, %c0_53], %177 {strides = array<i32>} : memref<2x1xf32, #tpu.memory_space<vmem>>, vector<2x1xf32>,
    return
  }
}

</mosaic_0001>

<llo_original>
// kernel: hybrid_forward.1
$region0: #{hybrid_forward.1}
  #allocation0 [shape = 'u32[]', space=smem, size = 0x4, offset = 0x4, fixed_abs, tag = 'smem constant byte address 0x4 - core index']
  #allocation1 [shape = 'u32[72,128]{1,0:T(1,128)}', space=vmem, size = 0x9000, scoped, tag = 'internal scratch']
  %s0 = inlined_call_operand.vmem [shape: s32[16,1], index: 0, kind: input, shape index: {}]
  %s1 = inlined_call_operand.vmem [shape: f32[16,16], index: 1, kind: input, shape index: {}]
  %s2 = inlined_call_operand.vmem [shape: f32[2,64], index: 2, kind: input, shape index: {}]
  %s3 = inlined_call_operand.hbm [shape: f32[32,384], index: 3, kind: input, shape index: {}]
  %s4 = inlined_call_operand.hbm [shape: f32[616,128], index: 4, kind: input, shape index: {}]
  %s5 = inlined_call_operand.vmem [shape: f32[2,1], index: 5, kind: output, shape index: {}]
  %s6 = sld [smem:[#allocation0]]
  $region38: #{hybrid_forward.1} parent=0
    _
  %s8 = ssub.s32 1, %s6
  %s9 = scalar_select 0, %s8, %s6
  $region1: #{hybrid_forward.1} parent=0
    #allocation2 [shape = 'u8[49152]{0}', space=vmem, size = 0xc000, scoped, tag = 'input window, operand 3, single buffered']
    #allocation3 [shape = 's32[1]{0}', space=sflag, size = 0x4, scoped, tag = 'scoped memory for hybrid_forward.1']
    #allocation4 [shape = 'u8[315392]{0}', space=vmem, size = 0x4d000, scoped, tag = 'input window, operand 4, single buffered']
    #allocation5 [shape = 's32[1]{0}', space=sflag, size = 0x4, scoped, tag = 'scoped memory for hybrid_forward.1']
    %10 = vsyncpa [#allocation3], 0
    %11 = vsyncpa [#allocation5], 0
    // Predicated region
    $region2: #{hybrid_forward.1} parent=1 // pred_check
      _
    $region3: #{hybrid_forward.1} parent=1 // pred_check_branch
      %13 = sbr.rel (0) target = $region5
    $region4: #{hybrid_forward.1} parent=1 // pred_region
      _
    $region5: #{hybrid_forward.1} parent=1 // pred_fallthru
      _
    // Predicated region
    $region6: #{hybrid_forward.1} parent=1 // pred_check
      _
    $region7: #{hybrid_forward.1} parent=1 // pred_check_branch
      %15 = sbr.rel (0) target = $region9
    $region8: #{hybrid_forward.1} parent=1 // pred_region
      _
    $region9: #{hybrid_forward.1} parent=1 // pred_fallthru
      _
    // Predicated region
    $region10: #{hybrid_forward.1} parent=1 // pred_check
      _
    $region11: #{hybrid_forward.1} parent=1 // pred_check_branch
      %17 = sbr.rel (0) target = $region13
    $region12: #{hybrid_forward.1} parent=1 // pred_region
      _
    $region13: #{hybrid_forward.1} parent=1 // pred_fallthru
      _
    // Predicated region
    $region14: #{hybrid_forward.1} parent=1 // pred_check
      _
    $region15: #{hybrid_forward.1} parent=1 // pred_check_branch
      %19 = sbr.rel (0) target = $region17
    $region16: #{hybrid_forward.1} parent=1 // pred_region
      %21 = vsyncadd [#allocation3], 0
      %s22 = sshll.u32 %s3, 4
      %s23 = int_to_ptr.hbm [resolvable:$true] %s22
      %s24 = sshll.u32 [#allocation2], 4
      %s25 = int_to_ptr.vmem [resolvable:$true] %s24
      %30 = dma.hbm_to_vmem [thread:$0]  %s23, 1536, %s25, [#allocation3], 384, 384, 24
    $region17: #{hybrid_forward.1} parent=1 // pred_fallthru
      _
    // Predicated region
    $region18: #{hybrid_forward.1} parent=1 // pred_check
      _
    $region19: #{hybrid_forward.1} parent=1 // pred_check_branch
      %32 = sbr.rel (0) target = $region21
    $region20: #{hybrid_forward.1} parent=1 // pred_region
      %34 = vsyncadd [#allocation5], 0
      %s35 = sshll.u32 %s4, 4
      %s36 = int_to_ptr.hbm [resolvable:$true] %s35
      %s37 = sshll.u32 [#allocation4], 4
      %s38 = int_to_ptr.vmem [resolvable:$true] %s37
      %43 = dma.hbm_to_vmem [thread:$0]  %s36, 9856, %s38, [#allocation5], 128, 128, 8
    $region21: #{hybrid_forward.1} parent=1 // pred_fallthru
      _
    // Predicated region
    $region22: #{hybrid_forward.1} parent=1 // pred_check
      _
    $region23: #{hybrid_forward.1} parent=1 // pred_check_branch
      %45 = sbr.rel (0) target = $region25
    $region24: #{hybrid_forward.1} parent=1 // pred_region
      %47 = dma.done [#allocation3], 1536
    $region25: #{hybrid_forward.1} parent=1 // pred_fallthru
      _
    // Predicated region
    $region26: #{hybrid_forward.1} parent=1 // pred_check
      _
    $region27: #{hybrid_forward.1} parent=1 // pred_check_branch
      %49 = sbr.rel (0) target = $region29
    $region28: #{hybrid_forward.1} parent=1 // pred_region
      %51 = dma.done [#allocation5], 9856
    $region29: #{hybrid_forward.1} parent=1 // pred_fallthru
      _
    %v52 = vld [vmem:[#allocation4 + $0x250] sm:$0xff]
    %v53 = vld [vmem:[#allocation4 + $0x258] sm:$0xff]
    %v54 = vld [vmem:[#allocation4 + $0x260] sm:$0xff]
    %v55 = vld [vmem:[%s0] sm:$0xff]
    %v56 = vld [vmem:[%s0 + $0x8] sm:$0xff]
    %v57 = vlaneseq
    %v58 = vand.u32 %v57, 127
    %59 = vset.pattern.permute.xlu0 0
    %60 = vperm.xlu0 %59, %v55
    %v61 = vpop.permute.xlu0 %60
    %62 = vset.pattern.permute.xlu0 0
    %63 = vperm.xlu0 %62, %v56
    %v64 = vpop.permute.xlu0 %63
    %vm65 = vcmp.eq.s32.totalorder %v58, %v61
    %vm66 = vcmp.eq.s32.totalorder %v58, %v64
    %v67 = vsel %vm65, 1, 0
    %v68 = vsel %vm66, 1, 0
    %v69 = vcvt.s32.f32 %v67
    %v70 = vcvt.s32.f32 %v68
    %v71 = vld [vmem:[#allocation4] sm:$0xff]
    %v72 = vld [vmem:[#allocation4 + $0x8] sm:$0xff]
    %v73 = vld [vmem:[#allocation4 + $0x10] sm:$0xff]
    %v74 = vld [vmem:[#allocation4 + $0x18] sm:$0xff]
    %v75 = vld [vmem:[#allocation4 + $0x20] sm:$0xff]
    %v76 = vld [vmem:[#allocation4 + $0x28] sm:$0xff]
    %v77 = vld [vmem:[#allocation4 + $0x30] sm:$0xff]
    %v78 = vld [vmem:[#allocation4 + $0x38] sm:$0xff]
    %v79 = vld [vmem:[#allocation4 + $0x40] sm:$0xff]
    %v80 = vld [vmem:[#allocation4 + $0x48] sm:$0xff]
    %v81 = vld [vmem:[#allocation4 + $0x50] sm:$0xff]
    %v82 = vld [vmem:[#allocation4 + $0x58] sm:$0xff]
    %v83 = vld [vmem:[#allocation4 + $0x60] sm:$0xff]
    %v84 = vld [vmem:[#allocation4 + $0x68] sm:$0xff]
    %v85 = vld [vmem:[#allocation4 + $0x70] sm:$0xff]
    %v86 = vld [vmem:[#allocation4 + $0x78] sm:$0xff]
    %v87 = vld [vmem:[#allocation4 + $0x80] sm:$0xff]
    %v88 = vld [vmem:[#allocation4 + $0x88] sm:$0xff]
    %89 = vmatpush.msra.mxu0 %v86
    %90 = vmatpush.msra.mxu0 %v85
    %91 = vmatpush.msra.mxu0 %v84
    %92 = vmatpush.msra.mxu0 %v83
    %93 = vmatpush.msra.mxu0 %v82
    %94 = vmatpush.msra.mxu0 %v81
    %95 = vmatpush.msra.mxu0 %v80
    %96 = vmatpush.msra.mxu0 %v79
    %97 = vmatpush.msra.mxu0 %v78
    %98 = vmatpush.msra.mxu0 %v77
    %99 = vmatpush.msra.mxu0 %v76
    %100 = vmatpush.msra.mxu0 %v75
    %101 = vmatpush.msra.mxu0 %v74
    %102 = vmatpush.msra.mxu0 %v73
    %103 = vmatpush.msra.mxu0 %v72
    %104 = vmatpush.msra.mxu0 %v71
    %105 = vmatmul.f32.gmra.mxu0 %v69
    %v106 = vpop.f32.mrf.mxu0
    %v107 = vadd.f32 %v87, %v106
    %108 = vmatmul.f32.gmra.mxu0 %v70
    %v109 = vpop.f32.mrf.mxu0
    %v110 = vadd.f32 %v88, %v109
    %111 = vdwg.mxu0
    %v112 = vld [vmem:[#allocation2] sm:$0xff]
    %v113 = vld [vmem:[#allocation2 + $0x8] sm:$0xff]
    %v114 = vld [vmem:[#allocation2 + $0x10] sm:$0xff]
    %v115 = vld [vmem:[#allocation2 + $0x18] sm:$0xff]
    %v116 = vld [vmem:[#allocation2 + $0x20] sm:$0xff]
    %v117 = vld [vmem:[#allocation2 + $0x28] sm:$0xff]
    %v118 = vld [vmem:[#allocation2 + $0x30] sm:$0xff]
    %v119 = vld [vmem:[#allocation2 + $0x38] sm:$0xff]
    %v120 = vld [vmem:[#allocation2 + $0x40] sm:$0xff]
    %v121 = vld [vmem:[#allocation2 + $0x48] sm:$0xff]
    %v122 = vld [vmem:[#allocation2 + $0x50] sm:$0xff]
    %v123 = vld [vmem:[#allocation2 + $0x58] sm:$0xff]
    %vm124 = vcmask 261120
    %v126 = vsel %vm124, %v107, 0
    %v129 = vsel %vm124, %v110, 0
    %131 = vmatpush.msra.mxu0 0.0
    %132 = vmatpush.msra.mxu0 0.0
    %133 = vmatpush.msra.mxu0 0.0
    %134 = vmatpush.msra.mxu0 0.0
    %135 = vmatpush.msra.mxu0 0.0
    %136 = vmatpush.msra.mxu0 0.0
    %137 = vmatpush.msra.mxu0 0.0
    %138 = vmatpush.msra.mxu0 0.0
    %139 = vmatpush.msra.mxu0 0.0
    %140 = vmatpush.msra.mxu0 0.0
    %141 = vmatpush.msra.mxu0 0.0
    %142 = vmatpush.msra.mxu0 0.0
    %143 = vmatpush.msra.mxu0 %v121
    %144 = vmatpush.msra.mxu0 %v118
    %145 = vmatpush.msra.mxu0 %v115
    %146 = vmatpush.msra.mxu0 %v112
    %147 = vmatmul.f32.gmra.mxu0 %v126
    %v148 = vpop.f32.mrf.mxu0
    %v149 = vadd.f32 0.0, %v148
    %150 = vmatmul.f32.gmra.mxu0 %v129
    %v151 = vpop.f32.mrf.mxu0
    %v152 = vadd.f32 0.0, %v151
    %153 = vdwg.mxu0
    %154 = vmatpush.msra.mxu0 0.0
    %155 = vmatpush.msra.mxu0 0.0
    %156 = vmatpush.msra.mxu0 0.0
    %157 = vmatpush.msra.mxu0 0.0
    %158 = vmatpush.msra.mxu0 0.0
    %159 = vmatpush.msra.mxu0 0.0
    %160 = vmatpush.msra.mxu0 0.0
    %161 = vmatpush.msra.mxu0 0.0
    %162 = vmatpush.msra.mxu0 0.0
    %163 = vmatpush.msra.mxu0 0.0
    %164 = vmatpush.msra.mxu0 0.0
    %165 = vmatpush.msra.mxu0 0.0
    %166 = vmatpush.msra.mxu0 %v122
    %167 = vmatpush.msra.mxu0 %v119
    %168 = vmatpush.msra.mxu0 %v116
    %169 = vmatpush.msra.mxu0 %v113
    %170 = vmatmul.f32.gmra.mxu0 %v126
    %v171 = vpop.f32.mrf.mxu0
    %v172 = vadd.f32 0.0, %v171
    %173 = vmatmul.f32.gmra.mxu0 %v129
    %v174 = vpop.f32.mrf.mxu0
    %v175 = vadd.f32 0.0, %v174
    %176 = vdwg.mxu0
    %177 = vmatpush.msra.mxu0 0.0
    %178 = vmatpush.msra.mxu0 0.0
    %179 = vmatpush.msra.mxu0 0.0
    %180 = vmatpush.msra.mxu0 0.0
    %181 = vmatpush.msra.mxu0 0.0
    %182 = vmatpush.msra.mxu0 0.0
    %183 = vmatpush.msra.mxu0 0.0
    %184 = vmatpush.msra.mxu0 0.0
    %185 = vmatpush.msra.mxu0 0.0
    %186 = vmatpush.msra.mxu0 0.0
    %187 = vmatpush.msra.mxu0 0.0
    %188 = vmatpush.msra.mxu0 0.0
    %189 = vmatpush.msra.mxu0 %v123
    %190 = vmatpush.msra.mxu0 %v120
    %191 = vmatpush.msra.mxu0 %v117
    %192 = vmatpush.msra.mxu0 %v114
    %193 = vmatmul.f32.gmra.mxu0 %v126
    %v194 = vpop.f32.mrf.mxu0
    %v195 = vadd.f32 0.0, %v194
    %196 = vmatmul.f32.gmra.mxu0 %v129
    %v197 = vpop.f32.mrf.mxu0
    %v198 = vadd.f32 0.0, %v197
    %199 = vdwg.mxu0
    %v200 = vperm.slane %v52, 0
    %v201 = vadd.f32 %v149, %v200
    %v202 = vadd.f32 %v152, %v200
    %v203 = vperm.slane %v52, 1
    %v204 = vadd.f32 %v172, %v203
    %v205 = vadd.f32 %v175, %v203
    %v206 = vperm.slane %v52, 2
    %v207 = vadd.f32 %v195, %v206
    %v208 = vadd.f32 %v198, %v206
    %209 = vmatpush.xpose.msra.mxu0 0.0
    %210 = vmatpush.xpose.msra.mxu0 0.0
    %211 = vmatpush.xpose.msra.mxu0 0.0
    %212 = vmatpush.xpose.msra.mxu0 0.0
    %213 = vmatpush.xpose.msra.mxu0 0.0
    %214 = vmatpush.xpose.msra.mxu0 0.0
    %215 = vmatpush.xpose.msra.mxu0 0.0
    %216 = vmatpush.xpose.msra.mxu0 0.0
    %217 = vmatpush.xpose.msra.mxu0 0.0
    %218 = vmatpush.xpose.msra.mxu0 0.0
    %219 = vmatpush.xpose.msra.mxu0 0.0
    %220 = vmatpush.xpose.msra.mxu0 0.0
    %221 = vmatpush.xpose.msra.mxu0 0.0
    %222 = vmatpush.xpose.msra.mxu0 0.0
    %223 = vmatpush.xpose.msra.mxu0 %v205
    %224 = vmatpush.xpose.msra.mxu0 %v204
    %225 = vmatmul.f32.gmra.mxu0 %v201
    %v226 = vpop.f32.mrf.mxu0
    %v227 = vadd.f32 0.0, %v226
    %228 = vmatmul.f32.gmra.mxu0 %v202
    %v229 = vpop.f32.mrf.mxu0
    %v230 = vadd.f32 0.0, %v229
    %231 = vdwg.mxu0
    %v232 = vmul.f32 %v227, 0.17677669
    %v233 = vmul.f32 %v230, 0.17677669
    %v234 = vld [vmem:[%s1] sm:$0xff]
    %v235 = vld [vmem:[%s1 + $0x8] sm:$0xff]
    %v236 = vadd.f32 %v232, %v234
    %v237 = vadd.f32 %v233, %v235
    %vm238 = vcmask 130048
    %v239 = vsel %vm238, %v236, -inf
    %240 = vmax.xlane.f32.xlu0 %v239
    %v241 = vpop.xlane.xlu0 %240
    %v242 = vsel %vm238, %v237, -inf
    %243 = vmax.xlane.f32.xlu0 %v242
    %v244 = vpop.xlane.xlu0 %243
    %v245 = vsub.f32 %v236, %v241
    %v246 = vsub.f32 %v237, %v244
    %v247 = vmul.f32 %v245, 1.442695
    %v248 = vpow.pop %v247
    %v249 = vmul.f32 %v246, 1.442695
    %v250 = vpow.pop %v249
    %v251 = vsel %vm238, %v248, 0.0
    %252 = vadd.xlane.f32.xlu0 %v251
    %v253 = vpop.xlane.xlu0 %252
    %v254 = vsel %vm238, %v250, 0.0
    %255 = vadd.xlane.f32.xlu0 %v254
    %v256 = vpop.xlane.xlu0 %255
    %v257 = vrcp.pop %v253
    %v258 = vrcp.pop %v256
    %v259 = vmul.f32 %v248, %v257
    %v260 = vmul.f32 %v250, %v258
    %v262 = vsel %vm238, %v259, 0
    %v265 = vsel %vm238, %v260, 0
    %267 = vmatpush.msra.mxu0 0.0
    %268 = vmatpush.msra.mxu0 0.0
    %269 = vmatpush.msra.mxu0 0.0
    %270 = vmatpush.msra.mxu0 0.0
    %271 = vmatpush.msra.mxu0 0.0
    %272 = vmatpush.msra.mxu0 0.0
    %273 = vmatpush.msra.mxu0 0.0
    %274 = vmatpush.msra.mxu0 0.0
    %275 = vmatpush.msra.mxu0 0.0
    %276 = vmatpush.msra.mxu0 0.0
    %277 = vmatpush.msra.mxu0 0.0
    %278 = vmatpush.msra.mxu0 0.0
    %279 = vmatpush.msra.mxu0 0.0
    %280 = vmatpush.msra.mxu0 0.0
    %281 = vmatpush.msra.mxu0 %v208
    %282 = vmatpush.msra.mxu0 %v207
    %283 = vmatmul.f32.gmra.mxu0 %v262
    %v284 = vpop.f32.mrf.mxu0
    %v285 = vadd.f32 0.0, %v284
    %286 = vmatmul.f32.gmra.mxu0 %v265
    %v287 = vpop.f32.mrf.mxu0
    %v288 = vadd.f32 0.0, %v287
    %289 = vdwg.mxu0
    %v290 = vld [vmem:[#allocation4 + $0x90] sm:$0xff]
    %v291 = vld [vmem:[#allocation4 + $0x98] sm:$0xff]
    %v292 = vld [vmem:[#allocation4 + $0xa0] sm:$0xff]
    %v293 = vld [vmem:[#allocation4 + $0xa8] sm:$0xff]
    %v294 = vld [vmem:[#allocation4 + $0xb0] sm:$0xff]
    %v295 = vld [vmem:[#allocation4 + $0xb8] sm:$0xff]
    %v296 = vld [vmem:[#allocation4 + $0xc0] sm:$0xff]
    %v297 = vld [vmem:[#allocation4 + $0xc8] sm:$0xff]
    %v298 = vld [vmem:[#allocation4 + $0xd0] sm:$0xff]
    %v299 = vld [vmem:[#allocation4 + $0xd8] sm:$0xff]
    %v300 = vld [vmem:[#allocation4 + $0xe0] sm:$0xff]
    %v301 = vld [vmem:[#allocation4 + $0xe8] sm:$0xff]
    %v302 = vld [vmem:[#allocation4 + $0xf0] sm:$0xff]
    %v303 = vld [vmem:[#allocation4 + $0xf8] sm:$0xff]
    %v304 = vld [vmem:[#allocation4 + $0x100] sm:$0xff]
    %v305 = vld [vmem:[#allocation4 + $0x108] sm:$0xff]
    %v306 = vperm.slane %v52, 3
    %307 = vmatpush.msra.mxu0 %v305
    %308 = vmatpush.msra.mxu0 %v304
    %309 = vmatpush.msra.mxu0 %v303
    %310 = vmatpush.msra.mxu0 %v302
    %311 = vmatpush.msra.mxu0 %v301
    %312 = vmatpush.msra.mxu0 %v300
    %313 = vmatpush.msra.mxu0 %v299
    %314 = vmatpush.msra.mxu0 %v298
    %315 = vmatpush.msra.mxu0 %v297
    %316 = vmatpush.msra.mxu0 %v296
    %317 = vmatpush.msra.mxu0 %v295
    %318 = vmatpush.msra.mxu0 %v294
    %319 = vmatpush.msra.mxu0 %v293
    %320 = vmatpush.msra.mxu0 %v292
    %321 = vmatpush.msra.mxu0 %v291
    %322 = vmatpush.msra.mxu0 %v290
    %323 = vmatmul.f32.gmra.mxu0 %v285
    %v324 = vpop.f32.mrf.mxu0
    %v325 = vadd.f32 %v306, %v324
    %326 = vmatmul.f32.gmra.mxu0 %v288
    %v327 = vpop.f32.mrf.mxu0
    %v328 = vadd.f32 %v306, %v327
    %329 = vdwg.mxu0
    %v330 = vadd.f32 %v107, %v325
    %v331 = vadd.f32 %v110, %v328
    %v332 = vsel %vm124, %v330, 0.0
    %333 = vadd.xlane.f32.xlu0 %v332
    %v334 = vpop.xlane.xlu0 %333
    %v335 = vsel %vm124, %v331, 0.0
    %336 = vadd.xlane.f32.xlu0 %v335
    %v337 = vpop.xlane.xlu0 %336
    %v338 = vrcp.pop 32.0
    %v339 = vmul.f32 32.0, %v338
    %v340 = vsub.f32 1.0, %v339
    %v341 = vmul.f32 %v338, %v340
    %v342 = vadd.f32 %v338, %v341
    %vm343 = vweird.f32 %v338
    %v344 = vsel %vm343, %v338, %v342
    %v345 = vmul.f32 %v334, %v344
    %v346 = vmul.f32 %v337, %v344
    %v347 = vsub.f32 %v330, %v345
    %v348 = vsub.f32 %v331, %v346
    %v349 = vmul.f32 %v347, %v347
    %v350 = vmul.f32 %v348, %v348
    %v351 = vsel %vm124, %v349, 0.0
    %352 = vadd.xlane.f32.xlu0 %v351
    %v353 = vpop.xlane.xlu0 %352
    %v354 = vsel %vm124, %v350, 0.0
    %355 = vadd.xlane.f32.xlu0 %v354
    %v356 = vpop.xlane.xlu0 %355
    %v357 = vmul.f32 %v353, %v344
    %v358 = vmul.f32 %v356, %v344
    %v359 = vadd.f32 %v357, 1e-05
    %v360 = vadd.f32 %v358, 1e-05
    %v361 = vrsqrt.pop %v359
    %v362 = vmul.f32 %v361, %v359
    %v363 = vmul.f32 %v362, %v361
    %v364 = vmul.f32 0.5, %v363
    %v365 = vsub.f32 1.5, %v364
    %v366 = vmul.f32 %v361, %v365
    %vm367 = vweird.f32 %v359
    %vm368 = vweird.f32 %v361
    %vm369 = vmor %vm367, %vm368
    %v370 = vsel %vm369, %v361, %v366
    %v371 = vrsqrt.pop %v360
    %v372 = vmul.f32 %v371, %v360
    %v373 = vmul.f32 %v372, %v371
    %v374 = vmul.f32 0.5, %v373
    %v375 = vsub.f32 1.5, %v374
    %v376 = vmul.f32 %v371, %v375
    %vm377 = vweird.f32 %v360
    %vm378 = vweird.f32 %v371
    %vm379 = vmor %vm377, %vm378
    %v380 = vsel %vm379, %v371, %v376
    %v381 = vmul.f32 %v347, %v370
    %v382 = vmul.f32 %v348, %v380
    %v383 = vperm.slane %v52, 4
    %v384 = vmul.f32 %v381, %v383
    %v385 = vmul.f32 %v382, %v383
    %v386 = vperm.slane %v52, 5
    %v387 = vadd.f32 %v384, %v386
    %v388 = vadd.f32 %v385, %v386
    %v389 = vld [vmem:[#allocation4 + $0x110] sm:$0xff]
    %v390 = vld [vmem:[#allocation4 + $0x118] sm:$0xff]
    %v391 = vld [vmem:[#allocation4 + $0x120] sm:$0xff]
    %v392 = vld [vmem:[#allocation4 + $0x128] sm:$0xff]
    %v393 = vperm.slane %v52, 6
    %v395 = vsel %vm124, %v387, 0
    %v398 = vsel %vm124, %v388, 0
    %400 = vmatpush.msra.mxu0 0.0
    %401 = vmatpush.msra.mxu0 0.0
    %402 = vmatpush.msra.mxu0 0.0
    %403 = vmatpush.msra.mxu0 0.0
    %404 = vmatpush.msra.mxu0 0.0
    %405 = vmatpush.msra.mxu0 0.0
    %406 = vmatpush.msra.mxu0 0.0
    %407 = vmatpush.msra.mxu0 0.0
    %408 = vmatpush.msra.mxu0 0.0
    %409 = vmatpush.msra.mxu0 0.0
    %410 = vmatpush.msra.mxu0 0.0
    %411 = vmatpush.msra.mxu0 0.0
    %412 = vmatpush.msra.mxu0 %v392
    %413 = vmatpush.msra.mxu0 %v391
    %414 = vmatpush.msra.mxu0 %v390
    %415 = vmatpush.msra.mxu0 %v389
    %416 = vmatmul.f32.gmra.mxu0 %v395
    %v417 = vpop.f32.mrf.mxu0
    %v418 = vadd.f32 %v393, %v417
    %419 = vmatmul.f32.gmra.mxu0 %v398
    %v420 = vpop.f32.mrf.mxu0
    %v421 = vadd.f32 %v393, %v420
    %422 = vdwg.mxu0
    %v423 = vmax.f32 %v418, 0.0
    %v424 = vmax.f32 %v421, 0.0
    %v425 = vld [vmem:[#allocation4 + $0x130] sm:$0xff]
    %v426 = vld [vmem:[#allocation4 + $0x138] sm:$0xff]
    %v427 = vld [vmem:[#allocation4 + $0x140] sm:$0xff]
    %v428 = vld [vmem:[#allocation4 + $0x148] sm:$0xff]
    %v429 = vld [vmem:[#allocation4 + $0x150] sm:$0xff]
    %v430 = vld [vmem:[#allocation4 + $0x158] sm:$0xff]
    %v431 = vld [vmem:[#allocation4 + $0x160] sm:$0xff]
    %v432 = vld [vmem:[#allocation4 + $0x168] sm:$0xff]
    %v433 = vperm.slane %v52, 7
    %vm434 = vcmask 523264
    %v436 = vsel %vm434, %v423, 0
    %v439 = vsel %vm434, %v424, 0
    %441 = vmatpush.msra.mxu0 0.0
    %442 = vmatpush.msra.mxu0 0.0
    %443 = vmatpush.msra.mxu0 0.0
    %444 = vmatpush.msra.mxu0 0.0
    %445 = vmatpush.msra.mxu0 0.0
    %446 = vmatpush.msra.mxu0 0.0
    %447 = vmatpush.msra.mxu0 0.0
    %448 = vmatpush.msra.mxu0 0.0
    %449 = vmatpush.msra.mxu0 %v432
    %450 = vmatpush.msra.mxu0 %v431
    %451 = vmatpush.msra.mxu0 %v430
    %452 = vmatpush.msra.mxu0 %v429
    %453 = vmatpush.msra.mxu0 %v428
    %454 = vmatpush.msra.mxu0 %v427
    %455 = vmatpush.msra.mxu0 %v426
    %456 = vmatpush.msra.mxu0 %v425
    %457 = vmatmul.f32.gmra.mxu0 %v436
    %v458 = vpop.f32.mrf.mxu0
    %v459 = vadd.f32 %v433, %v458
    %460 = vmatmul.f32.gmra.mxu0 %v439
    %v461 = vpop.f32.mrf.mxu0
    %v462 = vadd.f32 %v433, %v461
    %463 = vdwg.mxu0
    %v464 = vadd.f32 %v387, %v459
    %v465 = vadd.f32 %v388, %v462
    %v466 = vsel %vm124, %v464, 0.0
    %467 = vadd.xlane.f32.xlu0 %v466
    %v468 = vpop.xlane.xlu0 %467
    %v469 = vsel %vm124, %v465, 0.0
    %470 = vadd.xlane.f32.xlu0 %v469
    %v471 = vpop.xlane.xlu0 %470
    %v472 = vmul.f32 %v468, %v344
    %v473 = vmul.f32 %v471, %v344
    %v474 = vsub.f32 %v464, %v472
    %v475 = vsub.f32 %v465, %v473
    %v476 = vmul.f32 %v474, %v474
    %v477 = vmul.f32 %v475, %v475
    %v478 = vsel %vm124, %v476, 0.0
    %479 = vadd.xlane.f32.xlu0 %v478
    %v480 = vpop.xlane.xlu0 %479
    %v481 = vsel %vm124, %v477, 0.0
    %482 = vadd.xlane.f32.xlu0 %v481
    %v483 = vpop.xlane.xlu0 %482
    %v484 = vmul.f32 %v480, %v344
    %v485 = vmul.f32 %v483, %v344
    %v486 = vadd.f32 %v484, 1e-05
    %v487 = vadd.f32 %v485, 1e-05
    %v488 = vrsqrt.pop %v486
    %v489 = vmul.f32 %v488, %v486
    %v490 = vmul.f32 %v489, %v488
    %v491 = vmul.f32 0.5, %v490
    %v492 = vsub.f32 1.5, %v491
    %v493 = vmul.f32 %v488, %v492
    %vm494 = vweird.f32 %v486
    %vm495 = vweird.f32 %v488
    %vm496 = vmor %vm494, %vm495
    %v497 = vsel %vm496, %v488, %v493
    %v498 = vrsqrt.pop %v487
    %v499 = vmul.f32 %v498, %v487
    %v500 = vmul.f32 %v499, %v498
    %v501 = vmul.f32 0.5, %v500
    %v502 = vsub.f32 1.5, %v501
    %v503 = vmul.f32 %v498, %v502
    %vm504 = vweird.f32 %v487
    %vm505 = vweird.f32 %v498
    %vm506 = vmor %vm504, %vm505
    %v507 = vsel %vm506, %v498, %v503
    %v508 = vmul.f32 %v474, %v497
    %v509 = vmul.f32 %v475, %v507
    %v510 = vperm.slane %v53, 0
    %v511 = vmul.f32 %v508, %v510
    %v512 = vmul.f32 %v509, %v510
    %v513 = vperm.slane %v53, 1
    %v514 = vadd.f32 %v511, %v513
    %v515 = vadd.f32 %v512, %v513
    %v517 = vrot.slane %v515, 7
    %vm519 = vcmask 1040384
    %v520 = vsel %vm519, %v514, %v517
    %v521 = vld [vmem:[%s2] sm:$0x3]
    %v522 = vld [vmem:[#allocation4 + $0x170] sm:$0xff]
    %v523 = vld [vmem:[#allocation4 + $0x178] sm:$0xff]
    %v524 = vld [vmem:[#allocation4 + $0x180] sm:$0xff]
    %v525 = vld [vmem:[#allocation4 + $0x188] sm:$0xff]
    %v526 = vld [vmem:[#allocation4 + $0x190] sm:$0xff]
    %v527 = vld [vmem:[#allocation4 + $0x198] sm:$0xff]
    %v528 = vld [vmem:[#allocation4 + $0x1a0] sm:$0xff]
    %v529 = vld [vmem:[#allocation4 + $0x1a8] sm:$0xff]
    %v530 = vperm.slane %v53, 2
    %v532 = vsel %vm434, %v521, 0
    %534 = vmatpush.msra.mxu0 0.0
    %535 = vmatpush.msra.mxu0 0.0
    %536 = vmatpush.msra.mxu0 0.0
    %537 = vmatpush.msra.mxu0 0.0
    %538 = vmatpush.msra.mxu0 0.0
    %539 = vmatpush.msra.mxu0 0.0
    %540 = vmatpush.msra.mxu0 0.0
    %541 = vmatpush.msra.mxu0 0.0
    %542 = vmatpush.msra.mxu0 %v529
    %543 = vmatpush.msra.mxu0 %v528
    %544 = vmatpush.msra.mxu0 %v527
    %545 = vmatpush.msra.mxu0 %v526
    %546 = vmatpush.msra.mxu0 %v525
    %547 = vmatpush.msra.mxu0 %v524
    %548 = vmatpush.msra.mxu0 %v523
    %549 = vmatpush.msra.mxu0 %v522
    %550 = vmatmul.f32.gmra.mxu0 %v532
    %v551 = vpop.f32.mrf.mxu0
    %v552 = vadd.f32 %v530, %v551
    %553 = vdwg.mxu0
    %v554 = vmax.f32 %v552, 0.0
    %v555 = vld [vmem:[#allocation4 + $0x1b0] sm:$0xff]
    %v556 = vld [vmem:[#allocation4 + $0x1b8] sm:$0xff]
    %v557 = vld [vmem:[#allocation4 + $0x1c0] sm:$0xff]
    %v558 = vld [vmem:[#allocation4 + $0x1c8] sm:$0xff]
    %v559 = vld [vmem:[#allocation4 + $0x1d0] sm:$0xff]
    %v560 = vld [vmem:[#allocation4 + $0x1d8] sm:$0xff]
    %v561 = vperm.slane %v53, 3
    %vm562 = vcmask 392192
    %v564 = vsel %vm562, %v554, 0
    %566 = vmatpush.msra.mxu0 0.0
    %567 = vmatpush.msra.mxu0 0.0
    %568 = vmatpush.msra.mxu0 0.0
    %569 = vmatpush.msra.mxu0 0.0
    %570 = vmatpush.msra.mxu0 0.0
    %571 = vmatpush.msra.mxu0 0.0
    %572 = vmatpush.msra.mxu0 0.0
    %573 = vmatpush.msra.mxu0 0.0
    %574 = vmatpush.msra.mxu0 0.0
    %575 = vmatpush.msra.mxu0 0.0
    %576 = vmatpush.msra.mxu0 %v560
    %577 = vmatpush.msra.mxu0 %v559
    %578 = vmatpush.msra.mxu0 %v558
    %579 = vmatpush.msra.mxu0 %v557
    %580 = vmatpush.msra.mxu0 %v556
    %581 = vmatpush.msra.mxu0 %v555
    %582 = vmatmul.f32.gmra.mxu0 %v564
    %v583 = vpop.f32.mrf.mxu0
    %v584 = vadd.f32 %v561, %v583
    %585 = vdwg.mxu0
    %v586 = vmax.f32 %v584, 0.0
    %v587 = vld [vmem:[#allocation4 + $0x1e0] sm:$0xff]
    %v588 = vld [vmem:[#allocation4 + $0x1e8] sm:$0xff]
    %v589 = vld [vmem:[#allocation4 + $0x1f0] sm:$0xff]
    %v590 = vld [vmem:[#allocation4 + $0x1f8] sm:$0xff]
    %v591 = vld [vmem:[#allocation4 + $0x200] sm:$0xff]
    %v592 = vld [vmem:[#allocation4 + $0x208] sm:$0xff]
    %v593 = vld [vmem:[#allocation4 + $0x210] sm:$0xff]
    %v594 = vld [vmem:[#allocation4 + $0x218] sm:$0xff]
    %v596 = vsel %vm124, %v586, 0
    %598 = vmatpush.msra.mxu0 0.0
    %599 = vmatpush.msra.mxu0 0.0
    %600 = vmatpush.msra.mxu0 0.0
    %601 = vmatpush.msra.mxu0 0.0
    %602 = vmatpush.msra.mxu0 0.0
    %603 = vmatpush.msra.mxu0 0.0
    %604 = vmatpush.msra.mxu0 0.0
    %605 = vmatpush.msra.mxu0 0.0
    %606 = vmatpush.msra.mxu0 0.0
    %607 = vmatpush.msra.mxu0 0.0
    %608 = vmatpush.msra.mxu0 0.0
    %609 = vmatpush.msra.mxu0 0.0
    %610 = vmatpush.msra.mxu0 %v594
    %611 = vmatpush.msra.mxu0 %v593
    %612 = vmatpush.msra.mxu0 %v592
    %613 = vmatpush.msra.mxu0 %v591
    %614 = vmatmul.f32.gmra.mxu0 %v596
    %v615 = vpop.f32.mrf.mxu0
    %v616 = vadd.f32 0.0, %v615
    %617 = vdwg.mxu0
    %v619 = vsel %vm124, %v520, 0
    %621 = vmatpush.msra.mxu0 0.0
    %622 = vmatpush.msra.mxu0 0.0
    %623 = vmatpush.msra.mxu0 0.0
    %624 = vmatpush.msra.mxu0 0.0
    %625 = vmatpush.msra.mxu0 0.0
    %626 = vmatpush.msra.mxu0 0.0
    %627 = vmatpush.msra.mxu0 0.0
    %628 = vmatpush.msra.mxu0 0.0
    %629 = vmatpush.msra.mxu0 0.0
    %630 = vmatpush.msra.mxu0 0.0
    %631 = vmatpush.msra.mxu0 0.0
    %632 = vmatpush.msra.mxu0 0.0
    %633 = vmatpush.msra.mxu0 %v590
    %634 = vmatpush.msra.mxu0 %v589
    %635 = vmatpush.msra.mxu0 %v588
    %636 = vmatpush.msra.mxu0 %v587
    %637 = vmatmul.f32.gmra.mxu0 %v619
    %v638 = vpop.f32.mrf.mxu0
    %v639 = vadd.f32 %v616, %v638
    %640 = vdwg.mxu0
    %v641 = vperm.slane %v53, 4
    %v642 = vadd.f32 %v639, %v641
    %v643 = vperm.slane %v53, 7
    %v644 = vsub.f32 %v642, %v643
    %v645 = vadd.f32 %v54, 1e-05
    %v646 = vrsqrt.pop %v645
    %v647 = vmul.f32 %v646, %v645
    %v648 = vmul.f32 %v647, %v646
    %v649 = vmul.f32 0.5, %v648
    %v650 = vsub.f32 1.5, %v649
    %v651 = vmul.f32 %v646, %v650
    %vm652 = vweird.f32 %v645
    %vm653 = vweird.f32 %v646
    %vm654 = vmor %vm652, %vm653
    %v655 = vsel %vm654, %v646, %v651
    %v656 = vperm.slane %v655, 0
    %v657 = vmul.f32 %v644, %v656
    %v658 = vperm.slane %v53, 5
    %v659 = vmul.f32 %v657, %v658
    %v660 = vperm.slane %v53, 6
    %v661 = vadd.f32 %v659, %v660
    %v662 = vmax.f32 %v661, 0.0
    %v663 = vld [vmem:[#allocation4 + $0x220] sm:$0xff]
    %v664 = vld [vmem:[#allocation4 + $0x228] sm:$0xff]
    %v665 = vld [vmem:[#allocation4 + $0x230] sm:$0xff]
    %v666 = vld [vmem:[#allocation4 + $0x238] sm:$0xff]
    %v667 = vperm.slane %v54, 1
    %v669 = vsel %vm124, %v662, 0
    %671 = vmatpush.msra.mxu0 0.0
    %672 = vmatpush.msra.mxu0 0.0
    %673 = vmatpush.msra.mxu0 0.0
    %674 = vmatpush.msra.mxu0 0.0
    %675 = vmatpush.msra.mxu0 0.0
    %676 = vmatpush.msra.mxu0 0.0
    %677 = vmatpush.msra.mxu0 0.0
    %678 = vmatpush.msra.mxu0 0.0
    %679 = vmatpush.msra.mxu0 0.0
    %680 = vmatpush.msra.mxu0 0.0
    %681 = vmatpush.msra.mxu0 0.0
    %682 = vmatpush.msra.mxu0 0.0
    %683 = vmatpush.msra.mxu0 %v666
    %684 = vmatpush.msra.mxu0 %v665
    %685 = vmatpush.msra.mxu0 %v664
    %686 = vmatpush.msra.mxu0 %v663
    %687 = vmatmul.f32.gmra.mxu0 %v669
    %v688 = vpop.f32.mrf.mxu0
    %v689 = vadd.f32 %v667, %v688
    %690 = vdwg.mxu0
    %v691 = vperm.slane %v54, 4
    %v692 = vsub.f32 %v689, %v691
    %v693 = vperm.slane %v655, 5
    %v694 = vmul.f32 %v692, %v693
    %v695 = vperm.slane %v54, 2
    %v696 = vmul.f32 %v694, %v695
    %v697 = vperm.slane %v54, 3
    %v698 = vadd.f32 %v696, %v697
    %v699 = vmax.f32 %v698, 0.0
    %v700 = vld [vmem:[#allocation4 + $0x240] sm:$0xff]
    %v701 = vld [vmem:[#allocation4 + $0x248] sm:$0xff]
    %v702 = vperm.slane %v54, 6
    %v704 = vsel %vm238, %v699, 0
    %706 = vmatpush.msra.mxu0 0.0
    %707 = vmatpush.msra.mxu0 0.0
    %708 = vmatpush.msra.mxu0 0.0
    %709 = vmatpush.msra.mxu0 0.0
    %710 = vmatpush.msra.mxu0 0.0
    %711 = vmatpush.msra.mxu0 0.0
    %712 = vmatpush.msra.mxu0 0.0
    %713 = vmatpush.msra.mxu0 0.0
    %714 = vmatpush.msra.mxu0 0.0
    %715 = vmatpush.msra.mxu0 0.0
    %716 = vmatpush.msra.mxu0 0.0
    %717 = vmatpush.msra.mxu0 0.0
    %718 = vmatpush.msra.mxu0 0.0
    %719 = vmatpush.msra.mxu0 0.0
    %720 = vmatpush.msra.mxu0 %v701
    %721 = vmatpush.msra.mxu0 %v700
    %722 = vmatmul.f32.gmra.mxu0 %v704
    %v723 = vpop.f32.mrf.mxu0
    %v724 = vadd.f32 %v702, %v723
    %725 = vdwg.mxu0
    %vm726 = vcmask 1024
    %727 = vst.msk [vmem:[%s5] sm:$0x3] %vm726, %v724
    // Predicated region
    $region30: #{hybrid_forward.1} parent=1 // pred_check
      _
    $region31: #{hybrid_forward.1} parent=1 // pred_check_branch
      %729 = sbr.rel (0) target = $region33
    $region32: #{hybrid_forward.1} parent=1 // pred_region
      _
    $region33: #{hybrid_forward.1} parent=1 // pred_fallthru
      _
    // Predicated region
    $region34: #{hybrid_forward.1} parent=1 // pred_check
      _
    $region35: #{hybrid_forward.1} parent=1 // pred_check_branch
      %731 = sbr.rel (0) target = $region37
    $region36: #{hybrid_forward.1} parent=1 // pred_region
      _
    $region37: #{hybrid_forward.1} parent=1 // pred_fallthru
      _
    %732 = vsyncpa [#allocation3], 1
    %733 = vsyncpa [#allocation5], 1

</llo_original>
